<compile_context>
chip_gen: v6e
topology: v6e:2x2x1
jax: 0.10.0
libtpu: 0.0.40
codegen_flags: <defaults>
</compile_context>

<pallas_src>
import functools

import jax
import jax.numpy as jnp
from jax import lax
from jax.experimental import pallas as pl
from jax.experimental.pallas import tpu as pltpu


def _ce_kernel(preds_ref, labels_ref, loss_ref, cnt_ref, acc_ref, cacc_ref,
               *, hw, tile_hw, ignore_index):
    j = pl.program_id(1)

    # Zero the per-batch accumulators at the start of each pixel sweep.
    @pl.when(j == 0)
    def _():
        acc_ref[...] = jnp.zeros_like(acc_ref)
        cacc_ref[...] = jnp.zeros_like(cacc_ref)

    x = preds_ref[0]          # (C, T)  logits, native dtype
    lab = labels_ref[0]       # (1, T)  int32 labels

    # Numerically stable log-sum-exp over the class (sublane) axis.
    m = jnp.max(x, axis=0, keepdims=True)                        # (1, T)
    ex = jnp.exp((x - m).astype(jnp.float32))                    # (C, T) f32
    lse = jnp.log(jnp.sum(ex, axis=0, keepdims=True))            # (1, T) f32

    # Gather the target-class logit via an iota/one-hot select.
    cls = lax.broadcasted_iota(jnp.int32, x.shape, 0)             # (C, T)
    sel = jnp.sum(jnp.where(cls == lab, x, jnp.zeros_like(x)),
                  axis=0, keepdims=True)                          # (1, T)

    # Per-pixel NLL = logsumexp(x) - x[label].
    nll = lse + (m - sel).astype(jnp.float32)                     # (1, T)

    # Mask out-of-bounds pixels (cdiv padding) and ignored labels.
    pix = j * tile_hw + lax.broadcasted_iota(jnp.int32, (1, tile_hw), 1)
    valid = (pix < hw) & (lab != ignore_index)

    acc_ref[...] += jnp.where(valid, nll, 0.0)
    cacc_ref[...] += valid.astype(jnp.float32)

    # Dump per-lane partial sums / counts once per batch element.
    @pl.when(j == pl.num_programs(1) - 1)
    def _():
        loss_ref[0] = acc_ref[...]
        cnt_ref[0] = cacc_ref[...]


def _pick_tile_hw(hw, num_classes, pred_itemsize,
                  max_tile=4096, budget_bytes=10 * 1024 * 1024):
    """Largest power-of-two-ish pixel tile (multiple of 128) within budget."""
    if hw <= 128:
        return hw  # single full-row block (block dim == array dim is legal)
    hw_pad = ((hw + 127) // 128) * 128
    cap = min(max_tile, hw_pad)
    t = 128
    while t * 2 <= cap:
        nt = t * 2
        # double-buffered preds + labels blocks, plus scratch/output buffers
        footprint = (2 * num_classes * nt * pred_itemsize
                     + 2 * nt * 4 + 6 * nt * 4)
        if footprint > budget_bytes:
            break
        t = nt
    return t


def multi_class_criterion(preds, labels, *, ignore_index=-100):
    """Cross-entropy loss (mean over non-ignored pixels) for NCHW logits.

    preds:  [N, C, H, W] float
    labels: [N, H, W]    int (class indices in [0, C); ignore_index skipped)
    returns: scalar float32 loss
    """
    N, C, H, W = preds.shape
    HW = H * W

    # Pure reshapes, no data movement (no transpose pass over HBM).
    preds3 = preds.reshape(N, C, HW)
    labels3 = labels.reshape(N, 1, HW).astype(jnp.int32)

    tile_hw = _pick_tile_hw(HW, C, preds.dtype.itemsize)
    n_hw = pl.cdiv(HW, tile_hw)

    kernel = functools.partial(
        _ce_kernel, hw=HW, tile_hw=tile_hw, ignore_index=ignore_index)

    loss_sums, valid_cnts = pl.pallas_call(
        kernel,
        out_shape=(
            jax.ShapeDtypeStruct((N, 1, tile_hw), jnp.float32),
            jax.ShapeDtypeStruct((N, 1, tile_hw), jnp.float32),
        ),
        grid_spec=pltpu.PrefetchScalarGridSpec(
            num_scalar_prefetch=0,
            grid=(N, n_hw),
            in_specs=[
                pl.BlockSpec((1, C, tile_hw), lambda n, j: (n, 0, j)),
                pl.BlockSpec((1, 1, tile_hw), lambda n, j: (n, 0, j)),
            ],
            out_specs=(
                pl.BlockSpec((1, 1, tile_hw), lambda n, j: (n, 0, 0)),
                pl.BlockSpec((1, 1, tile_hw), lambda n, j: (n, 0, 0)),
            ),
            scratch_shapes=[
                pltpu.VMEM((1, tile_hw), jnp.float32),
                pltpu.VMEM((1, tile_hw), jnp.float32),
            ],
        ),
        compiler_params=pltpu.CompilerParams(
            dimension_semantics=("parallel", "arbitrary"),
            vmem_limit_bytes=32 * 1024 * 1024,
        ),
    )(preds3, labels3)

    # Single final reduction + mean over the number of non-ignored pixels
    # (matches torch.nn.CrossEntropyLoss mean semantics).
    return jnp.sum(loss_sums) / jnp.sum(valid_cnts)


if __name__ == "__main__":
    key = jax.random.PRNGKey(0)
    k_preds, k_labels = jax.random.split(key)

    N, C, H, W = 2, 4, 16, 16
    preds = jax.random.normal(k_preds, (N, C, H, W), dtype=jnp.float32)
    labels = jax.random.randint(k_labels, (N, H, W), 0, C, dtype=jnp.int32)

    loss = multi_class_criterion(preds, labels)
    jax.block_until_ready(loss)

    # Pure-JAX reference (same math as torch.nn.CrossEntropyLoss, mean).
    logits = jnp.transpose(preds, (0, 2, 3, 1)).reshape(-1, C)
    lab_flat = labels.reshape(-1)
    logz = jax.scipy.special.logsumexp(logits, axis=-1)
    ref = jnp.mean(logz - jnp.take_along_axis(
        logits, lab_flat[:, None], axis=-1)[:, 0])

    assert jnp.allclose(loss, ref, atol=1e-5, rtol=1e-5), (loss, ref)
    print("KERNEL_OK")
</pallas_src>

<mosaic_0001>
module attributes {stable_mosaic.version = 11 : i64} {
  func.func @_ce_kernel(%arg0: i32, %arg1: i32, %arg2: memref<1x4x256xf32, #tpu.memory_space<vmem>>, %arg3: memref<1x1x256xi32, #tpu.memory_space<vmem>>, %arg4: memref<1x1x256xf32, #tpu.memory_space<vmem>>, %arg5: memref<1x1x256xf32, #tpu.memory_space<vmem>>, %arg6: memref<1x256xf32, #tpu.memory_space<vmem>>, %arg7: memref<1x256xf32, #tpu.memory_space<vmem>>) attributes {dimension_semantics = [#tpu.dimension_semantics<parallel>, #tpu.dimension_semantics<arbitrary>], iteration_bounds = array<i64: 2, 1>, scalar_prefetch = 0 : i64, scratch_operands = 2 : i64, tpu.core_type = #tpu.core_type<tc>, window_params = [{transform_indices = @transform_0, window_bounds = array<i64: 1, 4, 256>}, {transform_indices = @transform_1, window_bounds = array<i64: 1, 1, 256>}, {transform_indices = @transform_2, window_bounds = array<i64: 1, 1, 256>}, {transform_indices = @transform_3, window_bounds = array<i64: 1, 1, 256>}]} {
    %c0_i32 = arith.constant 0 : i32
    %0 = arith.cmpi eq, %arg1, %c0_i32 : i32
    %1 = arith.extui %0 : i1 to i32
    %c0_i32_0 = arith.constant 0 : i32
    %2 = arith.cmpi ne, %1, %c0_i32_0 : i32
    scf.if %2 {
      %cst_21 = arith.constant 0.000000e+00 : f32
      %46 = vector.broadcast %cst_21 : f32 to vector<1x256xf32>
      %c0_22 = arith.constant 0 : index
      %c0_23 = arith.constant 0 : index
      %47 = vector.load %arg6[%c0_22, %c0_23] : memref<1x256xf32, #tpu.memory_space<vmem>>, vector<1x256xf32>
      tpu.vector_store %arg6[%c0_22, %c0_23], %46 {strides = array<i32>} : memref<1x256xf32, #tpu.memory_space<vmem>>, vector<1x256xf32>,
      %cst_24 = arith.constant 0.000000e+00 : f32
      %48 = vector.broadcast %cst_24 : f32 to vector<1x256xf32>
      %c0_25 = arith.constant 0 : index
      %c0_26 = arith.constant 0 : index
      %49 = vector.load %arg7[%c0_25, %c0_26] : memref<1x256xf32, #tpu.memory_space<vmem>>, vector<1x256xf32>
      tpu.vector_store %arg7[%c0_25, %c0_26], %48 {strides = array<i32>} : memref<1x256xf32, #tpu.memory_space<vmem>>, vector<1x256xf32>,
    } else {
    }
    %c0 = arith.constant 0 : index
    %c0_1 = arith.constant 0 : index
    %c0_2 = arith.constant 0 : index
    %3 = vector.load %arg2[%c0, %c0_1, %c0_2] : memref<1x4x256xf32, #tpu.memory_space<vmem>>, vector<1x4x256xf32>
    %4 = vector.shape_cast %3 : vector<1x4x256xf32> to vector<4x256xf32>
    %c0_3 = arith.constant 0 : index
    %c0_4 = arith.constant 0 : index
    %c0_5 = arith.constant 0 : index
    %5 = vector.load %arg3[%c0_3, %c0_4, %c0_5] : memref<1x1x256xi32, #tpu.memory_space<vmem>>, vector<1x1x256xi32>
    %6 = vector.shape_cast %5 : vector<1x1x256xi32> to vector<1x256xi32>
    %cst = arith.constant dense<0xFF800000> : vector<256xf32>
    %7 = vector.multi_reduction <maximumf>, %4, %cst [0] : vector<4x256xf32> to vector<256xf32>
    %8 = vector.shape_cast %7 : vector<256xf32> to vector<1x256xf32>
    %9 = vector.broadcast %8 : vector<1x256xf32> to vector<4x256xf32>
    %10 = arith.subf %4, %9 : vector<4x256xf32>
    %11 = math.exp %10 : vector<4x256xf32>
    %cst_6 = arith.constant dense<0.000000e+00> : vector<256xf32>
    %12 = vector.multi_reduction <add>, %11, %cst_6 [0] : vector<4x256xf32> to vector<256xf32>
    %13 = vector.shape_cast %12 : vector<256xf32> to vector<1x256xf32>
    %14 = math.log %13 : vector<1x256xf32>
    %15 = tpu.iota {dimensions = array<i32: 0>} : vector<4x256xi32>
    %16 = vector.broadcast %6 : vector<1x256xi32> to vector<4x256xi32>
    %17 = arith.cmpi eq, %15, %16 : vector<4x256xi32>
    %cst_7 = arith.constant 0.000000e+00 : f32
    %18 = vector.broadcast %cst_7 : f32 to vector<4x256xf32>
    %19 = arith.select %17, %4, %18 : vector<4x256xi1>, vector<4x256xf32>
    %cst_8 = arith.constant dense<0.000000e+00> : vector<256xf32>
    %20 = vector.multi_reduction <add>, %19, %cst_8 [0] : vector<4x256xf32> to vector<256xf32>
    %21 = vector.shape_cast %20 : vector<256xf32> to vector<1x256xf32>
    %22 = arith.subf %8, %21 : vector<1x256xf32>
    %23 = arith.addf %14, %22 : vector<1x256xf32>
    %c256_i32 = arith.constant 256 : i32
    %24 = arith.muli %arg1, %c256_i32 : i32
    %25 = tpu.iota {dimensions = array<i32: 1>} : vector<1x256xi32>
    %26 = vector.broadcast %24 : i32 to vector<1x256xi32>
    %27 = arith.addi %26, %25 : vector<1x256xi32>
    %c256_i32_9 = arith.constant 256 : i32
    %28 = vector.broadcast %c256_i32_9 : i32 to vector<1x256xi32>
    %29 = arith.cmpi slt, %27, %28 : vector<1x256xi32>
    %c-100_i32 = arith.constant -100 : i32
    %30 = vector.broadcast %c-100_i32 : i32 to vector<1x256xi32>
    %31 = arith.cmpi ne, %6, %30 : vector<1x256xi32>
    %32 = arith.andi %29, %31 : vector<1x256xi1>
    %c0_10 = arith.constant 0 : index
    %c0_11 = arith.constant 0 : index
    %33 = vector.load %arg6[%c0_10, %c0_11] : memref<1x256xf32, #tpu.memory_space<vmem>>, vector<1x256xf32>
    %cst_12 = arith.constant 0.000000e+00 : f32
    %34 = vector.broadcast %cst_12 : f32 to vector<1x256xf32>
    %35 = arith.select %32, %23, %34 : vector<1x256xi1>, vector<1x256xf32>
    %36 = arith.addf %33, %35 : vector<1x256xf32>
    %c0_13 = arith.constant 0 : index
    %c0_14 = arith.constant 0 : index
    %37 = vector.load %arg6[%c0_13, %c0_14] : memref<1x256xf32, #tpu.memory_space<vmem>>, vector<1x256xf32>
    tpu.vector_store %arg6[%c0_13, %c0_14], %36 {strides = array<i32>} : memref<1x256xf32, #tpu.memory_space<vmem>>, vector<1x256xf32>,
    %c0_15 = arith.constant 0 : index
    %c0_16 = arith.constant 0 : index
    %38 = vector.load %arg7[%c0_15, %c0_16] : memref<1x256xf32, #tpu.memory_space<vmem>>, vector<1x256xf32>
    %39 = arith.extui %32 : vector<1x256xi1> to vector<1x256xi32>
    %40 = arith.sitofp %39 : vector<1x256xi32> to vector<1x256xf32>
    %41 = arith.addf %38, %40 : vector<1x256xf32>
    %c0_17 = arith.constant 0 : index
    %c0_18 = arith.constant 0 : index
    %42 = vector.load %arg7[%c0_17, %c0_18] : memref<1x256xf32, #tpu.memory_space<vmem>>, vector<1x256xf32>
    tpu.vector_store %arg7[%c0_17, %c0_18], %41 {strides = array<i32>} : memref<1x256xf32, #tpu.memory_space<vmem>>, vector<1x256xf32>,
    %c0_i32_19 = arith.constant 0 : i32
    %43 = arith.cmpi eq, %arg1, %c0_i32_19 : i32
    %44 = arith.extui %43 : i1 to i32
    %c0_i32_20 = arith.constant 0 : i32
    %45 = arith.cmpi ne, %44, %c0_i32_20 : i32
    scf.if %45 {
      %c0_21 = arith.constant 0 : index
      %c0_22 = arith.constant 0 : index
      %46 = vector.load %arg6[%c0_21, %c0_22] : memref<1x256xf32, #tpu.memory_space<vmem>>, vector<1x256xf32>
      %c0_23 = arith.constant 0 : index
      %c0_24 = arith.constant 0 : index
      %c0_25 = arith.constant 0 : index
      %47 = vector.load %arg4[%c0_23, %c0_24, %c0_25] : memref<1x1x256xf32, #tpu.memory_space<vmem>>, vector<1x1x256xf32>
      %48 = vector.shape_cast %47 : vector<1x1x256xf32> to vector<1x256xf32>
      %49 = vector.shape_cast %46 : vector<1x256xf32> to vector<1x1x256xf32>
      tpu.vector_store %arg4[%c0_23, %c0_24, %c0_25], %49 {strides = array<i32>} : memref<1x1x256xf32, #tpu.memory_space<vmem>>, vector<1x1x256xf32>,
      %c0_26 = arith.constant 0 : index
      %c0_27 = arith.constant 0 : index
      %50 = vector.load %arg7[%c0_26, %c0_27] : memref<1x256xf32, #tpu.memory_space<vmem>>, vector<1x256xf32>
      %c0_28 = arith.constant 0 : index
      %c0_29 = arith.constant 0 : index
      %c0_30 = arith.constant 0 : index
      %51 = vector.load %arg5[%c0_28, %c0_29, %c0_30] : memref<1x1x256xf32, #tpu.memory_space<vmem>>, vector<1x1x256xf32>
      %52 = vector.shape_cast %51 : vector<1x1x256xf32> to vector<1x256xf32>
      %53 = vector.shape_cast %50 : vector<1x256xf32> to vector<1x1x256xf32>
      tpu.vector_store %arg5[%c0_28, %c0_29, %c0_30], %53 {strides = array<i32>} : memref<1x1x256xf32, #tpu.memory_space<vmem>>, vector<1x1x256xf32>,
    } else {
    }
    return
  }
  func.func @transform_0(%arg0: i32, %arg1: i32) -> (i32, i32, i32) {
    %c0_i32 = arith.constant 0 : i32
    %c0_i32_0 = arith.constant 0 : i32
    return %arg0, %c0_i32, %arg1 : i32, i32, i32
  }
  func.func @transform_1(%arg0: i32, %arg1: i32) -> (i32, i32, i32) {
    %c0_i32 = arith.constant 0 : i32
    %c0_i32_0 = arith.constant 0 : i32
    return %arg0, %c0_i32, %arg1 : i32, i32, i32
  }
  func.func @transform_2(%arg0: i32, %arg1: i32) -> (i32, i32, i32) {
    %c0_i32 = arith.constant 0 : i32
    %c0_i32_0 = arith.constant 0 : i32
    %c0_i32_1 = arith.constant 0 : i32
    return %arg0, %c0_i32, %c0_i32_0 : i32, i32, i32
  }
  func.func @transform_3(%arg0: i32, %arg1: i32) -> (i32, i32, i32) {
    %c0_i32 = arith.constant 0 : i32
    %c0_i32_0 = arith.constant 0 : i32
    %c0_i32_1 = arith.constant 0 : i32
    return %arg0, %c0_i32, %c0_i32_0 : i32, i32, i32
  }
}

</mosaic_0001>

<llo_original>
// kernel: tpu_custom_call.1
$region0: #{tpu_custom_call.1}
  #allocation0 [shape = 'u32[]', space=smem, size = 0x4, offset = 0x4, fixed_abs, tag = 'smem constant byte address 0x4 - core index']
  #allocation1 [shape = 'u32[144,128]{1,0:T(1,128)}', space=vmem, size = 0x12000, scoped, tag = 'internal scratch']
  #allocation2 [shape = 'f32[1,256]{1,0:T(1,128)}', space=vmem, size = 0x400, scoped, tag = 'scratch operand']
  #allocation3 [shape = 'f32[1,256]{1,0:T(1,128)}', space=vmem, size = 0x400, scoped, tag = 'scratch operand']
  %s0 = inlined_call_operand.hbm [shape: f32[2,4,256], index: 0, kind: input, shape index: {}]
  %s1 = inlined_call_operand.hbm [shape: s32[2,1,256], index: 1, kind: input, shape index: {}]
  %s2 = inlined_call_operand.hbm [shape: f32[2,1,256], index: 2, kind: output, shape index: {0}]
  %s3 = inlined_call_operand.hbm [shape: f32[2,1,256], index: 3, kind: output, shape index: {1}]
  %4 = xla_tuple %s2, %s3
  %s5 = sld [smem:[#allocation0]]
  $region65: #{tpu_custom_call.1} parent=0
    _
  %s7 = ssub.s32 1, %s5
  %s8 = scalar_select 0, %s7, %s5
  $region1: #{tpu_custom_call.1} parent=0
    #allocation4 [shape = 'u8[8192]{0}', space=vmem, size = 0x2000, scoped, tag = 'input window, operand 0']
    #allocation5 [shape = 's32[2]{0}', space=sflag, size = 0x8, scoped, tag = 'scoped memory for tpu_custom_call.1']
    #allocation6 [shape = 's32[2]{0}', space=sflag, size = 0x8, scoped, tag = 'scoped memory for tpu_custom_call.1']
    #allocation7 [shape = 'u8[2048]{0}', space=vmem, size = 0x800, scoped, tag = 'input window, operand 1']
    #allocation8 [shape = 's32[2]{0}', space=sflag, size = 0x8, scoped, tag = 'scoped memory for tpu_custom_call.1']
    #allocation9 [shape = 'u8[2048]{0}', space=vmem, size = 0x800, scoped, tag = 'output window, operand 0']
    #allocation10 [shape = 'u8[2048]{0}', space=vmem, size = 0x800, scoped, tag = 'output window, operand 1']
    #allocation11 [shape = 's32[2]{0}', space=sflag, size = 0x8, scoped, tag = 'scoped memory for tpu_custom_call.1']
    %9 = vsyncpa [#allocation5], 0
    %s10 = scalar_lea.sflag [#allocation5], 1
    %11 = vsyncpa %s10, 0
    %12 = vsyncpa [#allocation8], 0
    %s13 = scalar_lea.sflag [#allocation8], 1
    %14 = vsyncpa %s13, 0
    %15 = vsyncpa [#allocation6], 0
    %s16 = scalar_lea.sflag [#allocation6], 1
    %17 = vsyncpa %s16, 0
    %18 = vsyncpa [#allocation11], 0
    %s19 = scalar_lea.sflag [#allocation11], 1
    %20 = vsyncpa %s19, 0
    loop: start=0, step=1, limit=4
    $region2: #{tpu_custom_call.1} parent=1 // loop_pre_header
      _
    $region3: #{tpu_custom_call.1} parent=1 // loop_header
      %s22 = sphi 0, %s26
      %p23 = scmp.ge.s32.totalorder %s22, 4
      %s29 = sphi 0, %s41
      %s30 = sphi 0, %s37
      %s31 = sphi 0, %s29
      %s32 = sphi 0, %s30
      %s33 = sphi 0, %s31
      %s34 = sphi 0, %s32
      %s46 = sphi 0, %s48
      %s49 = sphi 0, %s46
      %s50 = sphi 0, %s49
      %s66 = sphi 0, %s50
      %s74 = sphi 0, %s76
      %s77 = sphi 0, %s74
      %s78 = sphi 0, %s77
      %s94 = sphi 0, %s78
      %s100 = sphi 0, %s102
      %s103 = sphi 0, %s100
      %s104 = sphi 0, %s103
      %s120 = sphi 0, %s104
      %s126 = sphi 0, %s128
      %s129 = sphi 0, %s126
      %s130 = sphi 0, %s129
      %s146 = sphi 0, %s130
    $region4: #{tpu_custom_call.1} parent=1 // loop_header_branch
      %25 = sbr.rel (%p23) target = $region8
    $region5: #{tpu_custom_call.1} parent=1 // loop_body
      %s27 = ssub.s32 %s22, 1
      %s28 = ssub.s32 %s22, 2
      %s35 = sadd.s32 1, %s30
      %p36 = scmp.ge.s32.totalorder %s35, 1
      %s37 = scalar_select %p36, 0, %s35
      %s38 = sadd.s32 1, %s29
      %s39 = scalar_select %p36, %s38, %s29
      %p40 = scmp.ge.s32.totalorder %s39, 2
      %s41 = scalar_select %p40, 0, %s39
      %s42 = ssub.s32 %s29, %s41
      %s43 = ssub.s32 %s30, %s37
      %s44 = sor.u32 %s42, %s43
      %p45 = scmp.eq.s32.totalorder %s44, 0
      %s47 = sadd.s32 %s46, 1
      %s48 = scalar_select %p45, %s46, %s47
      %p51 = pneg %p45
      %p52 = scmp.eq.s32.totalorder %s22, 1
      %p53 = por %p51, %p52
      %p54 = scmp.ne.s32.totalorder %s46, %s49
      %p55 = scmp.eq.s32.totalorder %s22, 0
      %p56 = por %p54, %p55
      %p57 = scmp.ne.s32.totalorder %s46, %s49
      %p58 = scmp.eq.s32.totalorder %s27, 1
      %p59 = por %p57, %p58
      %p60 = scmp.ne.s32.totalorder %s49, %s50
      %p61 = scmp.eq.s32.totalorder %s27, 0
      %p62 = por %p60, %p61
      %p63 = scmp.ne.s32.totalorder %s49, %s50
      %p64 = scmp.eq.s32.totalorder %s28, 1
      %p65 = por %p63, %p64
      %p67 = scmp.ne.s32.totalorder %s50, %s66
      %p68 = scmp.eq.s32.totalorder %s28, 0
      %p69 = por %p67, %p68
      %s70 = ssub.s32 %s29, %s41
      %s71 = ssub.s32 %s30, %s37
      %s72 = sor.u32 %s70, %s71
      %p73 = scmp.eq.s32.totalorder %s72, 0
      %s75 = sadd.s32 %s74, 1
      %s76 = scalar_select %p73, %s74, %s75
      %p79 = pneg %p73
      %p80 = scmp.eq.s32.totalorder %s22, 1
      %p81 = por %p79, %p80
      %p82 = scmp.ne.s32.totalorder %s74, %s77
      %p83 = scmp.eq.s32.totalorder %s22, 0
      %p84 = por %p82, %p83
      %p85 = scmp.ne.s32.totalorder %s74, %s77
      %p86 = scmp.eq.s32.totalorder %s27, 1
      %p87 = por %p85, %p86
      %p88 = scmp.ne.s32.totalorder %s77, %s78
      %p89 = scmp.eq.s32.totalorder %s27, 0
      %p90 = por %p88, %p89
      %p91 = scmp.ne.s32.totalorder %s77, %s78
      %p92 = scmp.eq.s32.totalorder %s28, 1
      %p93 = por %p91, %p92
      %p95 = scmp.ne.s32.totalorder %s78, %s94
      %p96 = scmp.eq.s32.totalorder %s28, 0
      %p97 = por %p95, %p96
      %s98 = ssub.s32 %s29, %s41
      %p99 = scmp.eq.s32.totalorder %s98, 0
      %s101 = sadd.s32 %s100, 1
      %s102 = scalar_select %p99, %s100, %s101
      %p105 = pneg %p99
      %p106 = scmp.eq.s32.totalorder %s22, 1
      %p107 = por %p105, %p106
      %p108 = scmp.ne.s32.totalorder %s100, %s103
      %p109 = scmp.eq.s32.totalorder %s22, 0
      %p110 = por %p108, %p109
      %p111 = scmp.ne.s32.totalorder %s100, %s103
      %p112 = scmp.eq.s32.totalorder %s27, 1
      %p113 = por %p111, %p112
      %p114 = scmp.ne.s32.totalorder %s103, %s104
      %p115 = scmp.eq.s32.totalorder %s27, 0
      %p116 = por %p114, %p115
      %p117 = scmp.ne.s32.totalorder %s103, %s104
      %p118 = scmp.eq.s32.totalorder %s28, 1
      %p119 = por %p117, %p118
      %p121 = scmp.ne.s32.totalorder %s104, %s120
      %p122 = scmp.eq.s32.totalorder %s28, 0
      %p123 = por %p121, %p122
      %s124 = ssub.s32 %s29, %s41
      %p125 = scmp.eq.s32.totalorder %s124, 0
      %s127 = sadd.s32 %s126, 1
      %s128 = scalar_select %p125, %s126, %s127
      %p131 = pneg %p125
      %p132 = scmp.eq.s32.totalorder %s22, 1
      %p133 = por %p131, %p132
      %p134 = scmp.ne.s32.totalorder %s126, %s129
      %p135 = scmp.eq.s32.totalorder %s22, 0
      %p136 = por %p134, %p135
      %p137 = scmp.ne.s32.totalorder %s126, %s129
      %p138 = scmp.eq.s32.totalorder %s27, 1
      %p139 = por %p137, %p138
      %p140 = scmp.ne.s32.totalorder %s129, %s130
      %p141 = scmp.eq.s32.totalorder %s27, 0
      %p142 = por %p140, %p141
      %p143 = scmp.ne.s32.totalorder %s129, %s130
      %p144 = scmp.eq.s32.totalorder %s28, 1
      %p145 = por %p143, %p144
      %p147 = scmp.ne.s32.totalorder %s130, %s146
      %p148 = scmp.eq.s32.totalorder %s28, 0
      %p149 = por %p147, %p148
      %p150 = scmp.le.s32.totalorder 1, %s22
      %p151 = scmp.lt.s32.totalorder %s22, 3
      %p152 = pnand %p150, %p151
      %p153 = pneg %p152
      // Predicated region
      $region9: #{tpu_custom_call.1} parent=5 // pred_check
        _
      $region10: #{tpu_custom_call.1} parent=5 // pred_check_branch
        %155 = sbr.rel (%p152) target = $region12
      $region11: #{tpu_custom_call.1} parent=5 // pred_region
        %s156 = ssub.s32 %s22, 1
      $region12: #{tpu_custom_call.1} parent=5 // pred_fallthru
        _
      %p157 = scmp.lt.s32.totalorder %s22, 2
      // Predicated region
      $region13: #{tpu_custom_call.1} parent=5 // pred_check
        %p158 = pneg %p157
      $region14: #{tpu_custom_call.1} parent=5 // pred_check_branch
        %160 = sbr.rel (%p158) target = $region16
      $region15: #{tpu_custom_call.1} parent=5 // pred_region
        // Predicated region
        $region17: #{tpu_custom_call.1} parent=15 // pred_check
          %p161 = pneg %p56
        $region18: #{tpu_custom_call.1} parent=15 // pred_check_branch
          %163 = sbr.rel (%p161) target = $region20
        $region19: #{tpu_custom_call.1} parent=15 // pred_region
          %s164 = sand.u32 %s46, 1
          %s165 = scalar_lea.sflag [#allocation5], %s164
          %s166 = sand.u32 %s46, 1
          %s167 = smul.addr %s166, 8
          %s168 = scalar_lea.vmem [#allocation4], %s167
          %s169 = smul.u32 2, %s30
          %s171 = ssub.s32 128, 128
          %172 = vsyncadd %s165, %s171
          %s173 = smul.addr %s29, 2
          %s174 = sadd.s32 %s169, %s173
          %s175 = smul.addr %s174, 64
          %s176 = scalar_lea.hbm %s0, %s175
          %s178 = sshll.u32 %s168, 4
          %s179 = int_to_ptr.vmem [resolvable:$true] %s178
          %181 = dma.hbm_to_vmem [thread:$0]  %s176, 128, %s179, %s165
        $region20: #{tpu_custom_call.1} parent=15 // pred_fallthru
          _
        // Predicated region
        $region21: #{tpu_custom_call.1} parent=15 // pred_check
          %p182 = pneg %p84
        $region22: #{tpu_custom_call.1} parent=15 // pred_check_branch
          %184 = sbr.rel (%p182) target = $region24
        $region23: #{tpu_custom_call.1} parent=15 // pred_region
          %s185 = sand.u32 %s74, 1
          %s186 = scalar_lea.sflag [#allocation8], %s185
          %s187 = sand.u32 %s74, 1
          %s188 = smul.addr %s187, 2
          %s189 = scalar_lea.vmem [#allocation7], %s188
          %s190 = smul.u32 2, %s30
          %s192 = ssub.s32 32, 32
          %193 = vsyncadd %s186, %s192
          %s194 = smul.addr %s29, 2
          %s195 = sadd.s32 %s190, %s194
          %s196 = smul.addr %s195, 16
          %s197 = scalar_lea.hbm %s1, %s196
          %s199 = sshll.u32 %s189, 4
          %s200 = int_to_ptr.vmem [resolvable:$true] %s199
          %202 = dma.hbm_to_vmem [thread:$0]  %s197, 32, %s200, %s186
        $region24: #{tpu_custom_call.1} parent=15 // pred_fallthru
          _
      $region16: #{tpu_custom_call.1} parent=5 // pred_fallthru
        _
      %p203 = scmp.le.s32.totalorder 1, %s22
      %p204 = scmp.lt.s32.totalorder %s22, 3
      %p205 = pnand %p203, %p204
      %p206 = pneg %p205
      // Predicated region
      $region25: #{tpu_custom_call.1} parent=5 // pred_check
        _
      $region26: #{tpu_custom_call.1} parent=5 // pred_check_branch
        %208 = sbr.rel (%p205) target = $region28
      $region27: #{tpu_custom_call.1} parent=5 // pred_region
        %s209 = ssub.s32 %s22, 1
        %s210 = sand.u32 %s49, 1
        %s211 = scalar_lea.sflag [#allocation5], %s210
        %s212 = sand.u32 %s49, 1
        %s213 = smul.addr %s212, 8
        %s214 = scalar_lea.vmem [#allocation4], %s213
        // Predicated region
        $region29: #{tpu_custom_call.1} parent=27 // pred_check
          %p215 = pneg %p62
        $region30: #{tpu_custom_call.1} parent=27 // pred_check_branch
          %217 = sbr.rel (%p215) target = $region32
        $region31: #{tpu_custom_call.1} parent=27 // pred_region
          %218 = dma.done %s211, 128
        $region32: #{tpu_custom_call.1} parent=27 // pred_fallthru
          _
        %s219 = sand.u32 %s77, 1
        %s220 = scalar_lea.sflag [#allocation8], %s219
        %s221 = sand.u32 %s77, 1
        %s222 = smul.addr %s221, 2
        %s223 = scalar_lea.vmem [#allocation7], %s222
        // Predicated region
        $region33: #{tpu_custom_call.1} parent=27 // pred_check
          %p224 = pneg %p90
        $region34: #{tpu_custom_call.1} parent=27 // pred_check_branch
          %226 = sbr.rel (%p224) target = $region36
        $region35: #{tpu_custom_call.1} parent=27 // pred_region
          %227 = dma.done %s220, 32
        $region36: #{tpu_custom_call.1} parent=27 // pred_fallthru
          _
        %s228 = sand.u32 %s49, 1
        %s229 = scalar_lea.sflag [#allocation5], %s228
        %s230 = sand.u32 %s49, 1
        %s231 = smul.addr %s230, 8
        %s232 = scalar_lea.vmem [#allocation4], %s231
        %p233 = pneg %p62
        %p234 = pneg %p59
        %s235 = sand.u32 %s77, 1
        %s236 = scalar_lea.sflag [#allocation8], %s235
        %s237 = sand.u32 %s77, 1
        %s238 = smul.addr %s237, 2
        %s239 = scalar_lea.vmem [#allocation7], %s238
        %p240 = pneg %p90
        %p241 = pneg %p87
        %p242 = pneg %p116
        %p243 = pneg %p113
        %s244 = sand.u32 %s103, 1
        %s245 = scalar_lea.sflag [#allocation6], %s244
        %s246 = sand.u32 %s103, 1
        %s247 = smul.addr %s246, 2
        %s248 = scalar_lea.vmem [#allocation9], %s247
        %p249 = pneg %p142
        %p250 = pneg %p139
        %s251 = sand.u32 %s129, 1
        %s252 = scalar_lea.sflag [#allocation11], %s251
        %s253 = sand.u32 %s129, 1
        %s254 = smul.addr %s253, 2
        %s255 = scalar_lea.vmem [#allocation10], %s254
        %s256 = smul.u32 2, %s32
        %s257 = smul.u32 2, %s32
        %p258 = scmp.eq.s32.totalorder %s32, 0
        // Predicated region
        $region37: #{tpu_custom_call.1} parent=27 // pred_check
          %p259 = pneg %p258
        $region38: #{tpu_custom_call.1} parent=27 // pred_check_branch
          %261 = sbr.rel (%p259) target = $region40
        $region39: #{tpu_custom_call.1} parent=27 // pred_region
          %v262 = vlaneseq
          %vm263 = vcmp.ge.s32.totalorder %v262, 0
          %vm264 = vcmp.lt.s32.totalorder %v262, 256
          %vm265 = vmand %vm263, %vm264
          %266 = vst.msk [vmem:[#allocation2] sm:$0x3] %vm265, 0.0
          %267 = vst.msk [vmem:[#allocation3] sm:$0x3] %vm265, 0.0
        $region40: #{tpu_custom_call.1} parent=27 // pred_fallthru
          _
        %v268 = vld [vmem:[%s214] sm:$0xff]
        %v269 = vld [vmem:[%s223] sm:$0x3]
        %v271 = vcombine.high %v268, %v268
        %vm273 = vcmask 1043456
        %v274 = vsel %vm273, %v268, -inf
        %v275 = vrot.slane %v274, 4
        %v276 = vmax.f32 %v274, %v275
        %v277 = vrot.slane %v276, 2
        %v278 = vmax.f32 %v276, %v277
        %v279 = vrot.slane %v278, 1
        %v280 = vmax.f32 %v278, %v279
        %v281 = vsel %vm273, %v271, -inf
        %v282 = vrot.slane %v281, 4
        %v283 = vmax.f32 %v281, %v282
        %v284 = vrot.slane %v283, 2
        %v285 = vmax.f32 %v283, %v284
        %v286 = vrot.slane %v285, 1
        %v287 = vmax.f32 %v285, %v286
        %v290 = vcombine.low %v280, %v287
        %v292 = vsub.f32 %v268, %v290
        %v293 = vmul.f32 %v292, 1.442695
        %v294 = vpow.pop %v293
        %v296 = vcombine.high %v294, %v294
        %v298 = vsel %vm273, %v294, 0.0
        %v299 = vrot.slane %v298, 4
        %v300 = vadd.f32 %v298, %v299
        %v301 = vrot.slane %v300, 2
        %v302 = vadd.f32 %v300, %v301
        %v303 = vrot.slane %v302, 1
        %v304 = vadd.f32 %v302, %v303
        %v305 = vsel %vm273, %v296, 0.0
        %v306 = vrot.slane %v305, 4
        %v307 = vadd.f32 %v305, %v306
        %v308 = vrot.slane %v307, 2
        %v309 = vadd.f32 %v307, %v308
        %v310 = vrot.slane %v309, 1
        %v311 = vadd.f32 %v309, %v310
        %v312 = vlog2.pop %v304
        %v313 = vmul.f32 %v312, 0.6931472
        %v314 = vlog2.pop %v311
        %v315 = vmul.f32 %v314, 0.6931472
        %v316 = vlaneseq
        %v317 = vshrl.u32 %v316, 7
        %v318 = vlaneseq
        %v319 = vshrl.u32 %v318, 7
        %v320 = vsub.s32 0, %v319
        %v321 = vrot.slane %v269, %v320
        %v322 = vlaneseq
        %v323 = vshrl.u32 %v322, 7
        %v324 = vsub.s32 1, %v323
        %v325 = vrot.slane %v269, %v324
        %vm326 = vcmp.eq.s32.totalorder %v317, %v321
        %vm327 = vcmp.eq.s32.totalorder %v317, %v325
        %v328 = vsel %vm326, %v268, 0.0
        %v329 = vsel %vm327, %v271, 0.0
        %v330 = vsel %vm273, %v328, 0.0
        %v331 = vrot.slane %v330, 4
        %v332 = vadd.f32 %v330, %v331
        %v333 = vrot.slane %v332, 2
        %v334 = vadd.f32 %v332, %v333
        %v335 = vrot.slane %v334, 1
        %v336 = vadd.f32 %v334, %v335
        %v337 = vsel %vm273, %v329, 0.0
        %v338 = vrot.slane %v337, 4
        %v339 = vadd.f32 %v337, %v338
        %v340 = vrot.slane %v339, 2
        %v341 = vadd.f32 %v339, %v340
        %v342 = vrot.slane %v341, 1
        %v343 = vadd.f32 %v341, %v342
        %v344 = vsub.f32 %v280, %v336
        %v345 = vsub.f32 %v287, %v343
        %v346 = vadd.f32 %v313, %v344
        %v347 = vadd.f32 %v315, %v345
        %s348 = smul.u32 %s32, 256
        %v349 = vlaneseq
        %v350 = vand.u32 %v349, 127
        %v351 = vadd.s32 %v350, 128
        %v352 = vstv %s348
        %v353 = vadd.s32 %v352, %v350
        %v354 = vadd.s32 %v352, %v351
        %vm355 = vcmp.lt.s32.totalorder %v353, 256
        %vm356 = vcmp.lt.s32.totalorder %v354, 256
        %vm357 = vcmp.ne.s32.totalorder %v269, 4294967196
        %v358 = vsel %vm357, 1, 0
        %v359 = vlaneseq
        %v360 = vshrl.u32 %v359, 7
        %v361 = vsub.s32 0, %v360
        %v362 = vrot.slane %v358, %v361
        %v363 = vlaneseq
        %v364 = vshrl.u32 %v363, 7
        %v365 = vsub.s32 1, %v364
        %v366 = vrot.slane %v358, %v365
        %vm367 = vcmp.ne.s32.totalorder %v362, 0
        %vm368 = vcmp.ne.s32.totalorder %v366, 0
        %vm369 = vmand %vm355, %vm367
        %vm370 = vmand %vm356, %vm368
        %v371 = vld [vmem:[#allocation2] sm:$0x3]
        %v372 = vsel %vm369, %v346, 0.0
        %v373 = vsel %vm370, %v347, 0.0
        %v376 = vcombine.low %v372, %v373
        %v378 = vunpack.c.l.s4 1966171168
        %v379 = vunpack.c.0.s8 %v378
        %v380 = vlaneseq
        %v381 = vshrl.u32 %v380, 7
        %v382 = vsub.s32 %v379, %v381
        %v383 = vrot.slane %v376, %v382
        %v385 = vunpack.c.l.s4 1966171168
        %v386 = vunpack.c.0.s8 %v385
        %v387 = vlaneseq
        %v388 = vshrl.u32 %v387, 7
        %v389 = vsub.s32 %v386, %v388
        %v390 = vrot.slane %v383, %v389
        %v392 = vadd.f32 %v371, %v390
        %v393 = vlaneseq
        %vm394 = vcmp.ge.s32.totalorder %v393, 0
        %vm395 = vcmp.lt.s32.totalorder %v393, 256
        %vm396 = vmand %vm394, %vm395
        %397 = vst.msk [vmem:[#allocation2] sm:$0x3] %vm396, %v392
        %v398 = vld [vmem:[#allocation3] sm:$0x3]
        %v399 = vsel %vm369, 1, 0
        %v400 = vsel %vm370, 1, 0
        %v401 = vcvt.s32.f32 %v399
        %v402 = vcvt.s32.f32 %v400
        %v405 = vcombine.low %v401, %v402
        %v407 = vunpack.c.l.s4 1966171168
        %v408 = vunpack.c.0.s8 %v407
        %v409 = vlaneseq
        %v410 = vshrl.u32 %v409, 7
        %v411 = vsub.s32 %v408, %v410
        %v412 = vrot.slane %v405, %v411
        %v414 = vunpack.c.l.s4 1966171168
        %v415 = vunpack.c.0.s8 %v414
        %v416 = vlaneseq
        %v417 = vshrl.u32 %v416, 7
        %v418 = vsub.s32 %v415, %v417
        %v419 = vrot.slane %v412, %v418
        %v421 = vadd.f32 %v398, %v419
        %422 = vst.msk [vmem:[#allocation3] sm:$0x3] %vm396, %v421
        // Predicated region
        $region41: #{tpu_custom_call.1} parent=27 // pred_check
          %p423 = pneg %p258
        $region42: #{tpu_custom_call.1} parent=27 // pred_check_branch
          %425 = sbr.rel (%p423) target = $region44
        $region43: #{tpu_custom_call.1} parent=27 // pred_region
          %v426 = vld [vmem:[#allocation2] sm:$0x3]
          %427 = vst.msk [vmem:[%s248] sm:$0x3] %vm396, %v426
          %v428 = vld [vmem:[#allocation3] sm:$0x3]
          %429 = vst.msk [vmem:[%s255] sm:$0x3] %vm396, %v428
        $region44: #{tpu_custom_call.1} parent=27 // pred_fallthru
          _
        %s430 = sand.u32 %s103, 1
        %s431 = scalar_lea.sflag [#allocation6], %s430
        %s432 = sand.u32 %s103, 1
        %s433 = smul.addr %s432, 2
        %s434 = scalar_lea.vmem [#allocation9], %s433
        %s435 = sand.u32 %s129, 1
        %s436 = scalar_lea.sflag [#allocation11], %s435
        %s437 = sand.u32 %s129, 1
        %s438 = smul.addr %s437, 2
        %s439 = scalar_lea.vmem [#allocation10], %s438
        // Predicated region
        $region45: #{tpu_custom_call.1} parent=27 // pred_check
          %p440 = pneg %p113
        $region46: #{tpu_custom_call.1} parent=27 // pred_check_branch
          %442 = sbr.rel (%p440) target = $region48
        $region47: #{tpu_custom_call.1} parent=27 // pred_region
          %s444 = ssub.s32 32, 32
          %445 = vsyncadd %s431, %s444
          %s446 = smul.addr %s31, 2
          %s447 = smul.addr %s446, 16
          %s448 = scalar_lea.hbm %s2, %s447
          %s450 = sshll.u32 %s434, 4
          %s451 = int_to_ptr.vmem [resolvable:$true] %s450
          %453 = dma.vmem_to_hbm [thread:$0]  %s451, 32, %s448, %s431
        $region48: #{tpu_custom_call.1} parent=27 // pred_fallthru
          _
        // Predicated region
        $region49: #{tpu_custom_call.1} parent=27 // pred_check
          %p454 = pneg %p139
        $region50: #{tpu_custom_call.1} parent=27 // pred_check_branch
          %456 = sbr.rel (%p454) target = $region52
        $region51: #{tpu_custom_call.1} parent=27 // pred_region
          %s458 = ssub.s32 32, 32
          %459 = vsyncadd %s436, %s458
          %s460 = smul.addr %s31, 2
          %s461 = smul.addr %s460, 16
          %s462 = scalar_lea.hbm %s3, %s461
          %s464 = sshll.u32 %s439, 4
          %s465 = int_to_ptr.vmem [resolvable:$true] %s464
          %467 = dma.vmem_to_hbm [thread:$0]  %s465, 32, %s462, %s436
        $region52: #{tpu_custom_call.1} parent=27 // pred_fallthru
          _
      $region28: #{tpu_custom_call.1} parent=5 // pred_fallthru
        _
      %p468 = scmp.le.s32.totalorder 2, %s22
      // Predicated region
      $region53: #{tpu_custom_call.1} parent=5 // pred_check
        %p469 = pneg %p468
      $region54: #{tpu_custom_call.1} parent=5 // pred_check_branch
        %471 = sbr.rel (%p469) target = $region56
      $region55: #{tpu_custom_call.1} parent=5 // pred_region
        %s472 = ssub.s32 %s22, 2
        // Predicated region
        $region57: #{tpu_custom_call.1} parent=55 // pred_check
          %p473 = pneg %p119
        $region58: #{tpu_custom_call.1} parent=55 // pred_check_branch
          %475 = sbr.rel (%p473) target = $region60
        $region59: #{tpu_custom_call.1} parent=55 // pred_region
          %s476 = sand.u32 %s104, 1
          %s477 = scalar_lea.sflag [#allocation6], %s476
          %s478 = sand.u32 %s104, 1
          %s479 = smul.addr %s478, 2
          %s480 = scalar_lea.vmem [#allocation9], %s479
          %481 = dma.done %s477, 32
        $region60: #{tpu_custom_call.1} parent=55 // pred_fallthru
          _
        // Predicated region
        $region61: #{tpu_custom_call.1} parent=55 // pred_check
          %p482 = pneg %p145
        $region62: #{tpu_custom_call.1} parent=55 // pred_check_branch
          %484 = sbr.rel (%p482) target = $region64
        $region63: #{tpu_custom_call.1} parent=55 // pred_region
          %s485 = sand.u32 %s130, 1
          %s486 = scalar_lea.sflag [#allocation11], %s485
          %s487 = sand.u32 %s130, 1
          %s488 = smul.addr %s487, 2
          %s489 = scalar_lea.vmem [#allocation10], %s488
          %490 = dma.done %s486, 32
        $region64: #{tpu_custom_call.1} parent=55 // pred_fallthru
          _
      $region56: #{tpu_custom_call.1} parent=5 // pred_fallthru
        _
    $region6: #{tpu_custom_call.1} parent=1 // loop_footer
      %s26 = sadd.s32 1, %s22
    $region7: #{tpu_custom_call.1} parent=1 // loop_footer_branch
      %21 = sbr.rel target = $region3
    $region8: #{tpu_custom_call.1} parent=1 // loop_exit
      _
    %491 = vsyncpa [#allocation5], 1
    %s492 = scalar_lea.sflag [#allocation5], 1
    %493 = vsyncpa %s492, 1
    %494 = vsyncpa [#allocation8], 1
    %s495 = scalar_lea.sflag [#allocation8], 1
    %496 = vsyncpa %s495, 1
    %497 = vsyncpa [#allocation6], 1
    %s498 = scalar_lea.sflag [#allocation6], 1
    %499 = vsyncpa %s498, 1
    %500 = vsyncpa [#allocation11], 1
    %s501 = scalar_lea.sflag [#allocation11], 1
    %502 = vsyncpa %s501, 1

</llo_original>
